<compile_context>
chip_gen: v7x
topology: tpu7x:2x2x1
jax: 0.10.0
libtpu: 0.0.40
codegen_flags: <defaults>
</compile_context>

<pallas_src>
import functools

import jax
import jax.numpy as jnp
from jax import lax
from jax.experimental import pallas as pl
from jax.experimental.pallas import tpu as pltpu


# ------------------------------------------------------------------- kernel --

def _fused_forward_kernel(coef_ref, x_ref, n_ref, w_ref, b_ref, o_ref, acc_ref,
                          *, s_valid, need_mask):
    """One streamed spatial tile of the whole forward pass.

    coef_ref : SMEM (2, B) f32   row 0: sqrt(acp[t_b]); row 1: sqrt(1-acp[t_b])
    x_ref    : VMEM (B, 8, TS)   latents tile, NCHW layout (channels=sublanes,
                                 spatial=lanes); streamed in its source dtype
    n_ref    : VMEM (B, 8, TS)   noise tile (same layout); target == noise
    w_ref    : VMEM (8, 8)  f32  fused group_out∘UNet(identity)∘group_in map,
                                 (out_ch, in_ch) orientation for left-multiply
    b_ref    : VMEM (8, 1)  f32  fused bias, pre-scaled by B (batch-sum form)
    o_ref    : VMEM (8, 128) f32 per-outer-chunk partial-loss block
    acc_ref  : VMEM (8, TS) f32  running sum of squared batch-sum differences
    """
    t = pl.program_id(1)

    @pl.when(t == 0)
    def _init():
        acc_ref[...] = jnp.zeros_like(acc_ref)

    bsz = x_ref.shape[0]
    sum_noisy = None
    sum_noise = None
    # DDPM add_noise, summed over the batch: the loss only needs the batch
    # mean and the whole network is linear, so mean/sum commutes with it.
    for b in range(bsz):
        a_b = coef_ref[0, b]
        c_b = coef_ref[1, b]
        x_b = x_ref[b].astype(jnp.float32)        # (8, TS)
        n_b = n_ref[b].astype(jnp.float32)        # (8, TS)
        noisy_b = a_b * x_b + c_b * n_b
        if b == 0:
            sum_noisy, sum_noise = noisy_b, n_b
        else:
            sum_noisy = sum_noisy + noisy_b
            sum_noise = sum_noise + n_b

    # group_in(8->512->4) ∘ identity-UNet ∘ group_out(4->512->8) collapsed into
    # ONE 8x8 channel mix (exact algebra, fused host-side): single MXU pass.
    pred_sum = jnp.dot(w_ref[...], sum_noisy,
                       preferred_element_type=jnp.float32) + b_ref[...]

    # Batch-sum of (model_pred - target); target = noise (epsilon prediction).
    diff = pred_sum - sum_noise                   # (8, TS) == B * batch-mean diff

    if need_mask:
        # Padded spatial positions are NOT loss-neutral (pred of zero = bias).
        off = (pl.program_id(0) * pl.num_programs(1) + t) * x_ref.shape[2]
        col = lax.broadcasted_iota(jnp.int32, diff.shape, 1) + off
        diff = jnp.where(col < s_valid, diff, 0.0)

    acc_ref[...] += diff * diff

    @pl.when(t == pl.num_programs(1) - 1)
    def _finalize():
        total = acc_ref[:, 0:128]
        for j in range(1, acc_ref.shape[1] // 128):
            total = total + acc_ref[:, j * 128:(j + 1) * 128]
        o_ref[...] = total


# ------------------------------------------------------------------- tiling --

def _round_up(a, m):
    return -(-a // m) * m


def _choose_tiling(s, batch, elem_bytes, max_block_bytes):
    """Pick (s_pad, ts, g_chunks, t_inner) for streaming (B, 8, S) slabs.

    ts is a multiple of 128 lanes; one input block is (B, 8, ts).  Prefers
    zero padding, then large tiles; with >= 2 tiles the tile count is forced
    even so the 'parallel' outer axis can feed both v7x TensorCores.
    """
    ts_cap = max(128, ((max_block_bytes // (batch * 8 * elem_bytes)) // 128) * 128)
    if s <= ts_cap:                               # single full-extent tile
        s_pad = _round_up(s, 128)
        return s_pad, s_pad, 1, 1
    ts_floor = max(128, ((ts_cap // 4) // 128) * 128)
    best = None
    for ts in range(ts_cap, ts_floor - 1, -128):
        s_pad = _round_up(s, ts)
        n = s_pad // ts
        if n >= 2 and n % 2 == 1:                 # even tile count for megacore
            n += 1
            s_pad += ts
        waste = s_pad - s
        key = (waste > 0, waste, -ts)
        if best is None or key < best[0]:
            best = (key, s_pad, ts, n)
    _, s_pad, ts, n = best
    g_chunks = 2 if (n >= 2 and n % 2 == 0) else 1
    return s_pad, ts, g_chunks, n // g_chunks


# -------------------------------------------------------------- param fusion --

def fuse_group_params(gin_w1, gin_b1, gin_w2, gin_b2,
                      gout_w1, gout_b1, gout_w2, gout_b2):
    """Exact algebraic fusion of group_in, the identity UNet and group_out
    into a single 8x8 channel map + bias (no 512-wide hidden activation).

    Returns (w_left, b_full): w_left is (out_ch, in_ch) for left-multiplying
    channel-major (8, S) tiles; b_full is (8,)."""
    w_in = gin_w1 @ gin_w2                        # (8, 4)
    b_in = gin_b1 @ gin_w2 + gin_b2               # (4,)
    w_out = gout_w1 @ gout_w2                     # (4, 8)
    b_out = gout_b1 @ gout_w2 + gout_b2           # (8,)
    w_full = w_in @ w_out                         # (8, 8)  in->out (NHWC right-mult)
    b_full = b_in @ w_out + b_out                 # (8,)
    return w_full.T.astype(jnp.float32), b_full.astype(jnp.float32)


# ----------------------------------------------------------------- wrapper ---

def audio_diffusion_forward(latents_nchw, noise_nchw, fused_params, alphas_cumprod,
                            validation_mode=True, rng_key=None,
                            max_block_bytes=2 << 20):
    """Fused forward pass -> scalar training loss (snr_gamma=None path)."""
    B, C, H, W = latents_nchw.shape
    assert C == 8, "group_in expects 8 input channels"
    S = H * W

    num_train_timesteps = alphas_cumprod.shape[0]
    if validation_mode:
        timesteps = jnp.full((B,), num_train_timesteps // 2, dtype=jnp.int32)
    else:
        # TODO(synk): torch.randint RNG stream not reproduced bit-for-bit.
        key = rng_key if rng_key is not None else jax.random.PRNGKey(0)
        timesteps = jax.random.randint(key, (B,), 0, num_train_timesteps,
                                       dtype=jnp.int32)

    acp_t = alphas_cumprod[timesteps].astype(jnp.float32)          # (B,)
    coefs = jnp.stack([jnp.sqrt(acp_t), jnp.sqrt(1.0 - acp_t)])    # (2, B) -> SMEM

    w_left, b_full = fused_params
    b_kernel = (float(B) * b_full).reshape(8, 1)                   # batch-sum bias

    elem_bytes = latents_nchw.dtype.itemsize
    S_pad, TS, g_chunks, t_inner = _choose_tiling(S, B, elem_bytes, max_block_bytes)

    # NCHW kept as-is: channels on sublanes, spatial on lanes.  The reshape is
    # a free view (no NCHW->NHWC transpose, no dtype cast: bf16 streams as
    # bf16, f32 accumulation happens in-kernel).
    lat = latents_nchw.reshape(B, C, S)
    noi = noise_nchw.reshape(B, C, S)
    if S_pad != S:
        pad = ((0, 0), (0, 0), (0, S_pad - S))
        lat = jnp.pad(lat, pad)
        noi = jnp.pad(noi, pad)

    kernel = functools.partial(_fused_forward_kernel,
                               s_valid=S, need_mask=(S_pad != S))

    def slab_map(g, t):
        return (0, 0, g * t_inner + t)

    flops = 2 * 8 * 8 * S_pad + 10 * B * 8 * S_pad
    bytes_accessed = 2 * B * 8 * S_pad * elem_bytes + g_chunks * 8 * 128 * 4

    partials = pl.pallas_call(
        kernel,
        out_shape=jax.ShapeDtypeStruct((g_chunks * 8, 128), jnp.float32),
        grid=(g_chunks, t_inner),
        in_specs=[
            pl.BlockSpec(memory_space=pltpu.MemorySpace.SMEM),     # DDPM coefs
            pl.BlockSpec((B, 8, TS), slab_map),                    # latents slab
            pl.BlockSpec((B, 8, TS), slab_map),                    # noise slab
            pl.BlockSpec((8, 8), lambda g, t: (0, 0)),             # fused 8x8 map
            pl.BlockSpec((8, 1), lambda g, t: (0, 0)),             # fused bias * B
        ],
        out_specs=pl.BlockSpec((8, 128), lambda g, t: (g, 0)),
        scratch_shapes=[pltpu.VMEM((8, TS), jnp.float32)],
        compiler_params=pltpu.CompilerParams(
            dimension_semantics=("parallel", "arbitrary"),
            vmem_limit_bytes=32 << 20),
        cost_estimate=pl.CostEstimate(
            flops=int(flops), transcendentals=0,
            bytes_accessed=int(bytes_accessed)),
    )(coefs, lat, noi, w_left, b_kernel)

    # loss = F.mse_loss(model_pred.mean(0)[None], target.mean(0)[None]):
    # partials hold sum over (c, hw) of (sum_b diff)^2 == B^2 * sum_chw d^2.
    return jnp.sum(partials) / float(C * S * B * B)


# --------------------------------------------------- reference / param init --

def init_linear(key, fan_in, fan_out):
    """PyTorch-style nn.Linear init: uniform(-1/sqrt(fan_in), 1/sqrt(fan_in))."""
    kw, kb = jax.random.split(key)
    bound = 1.0 / float(fan_in) ** 0.5
    w = jax.random.uniform(kw, (fan_in, fan_out), jnp.float32, -bound, bound)
    b = jax.random.uniform(kb, (fan_out,), jnp.float32, -bound, bound)
    return w, b


def make_ddpm_alphas_cumprod(num_train_timesteps=1000, beta_start=1e-4,
                             beta_end=0.02):
    betas = jnp.linspace(beta_start, beta_end, num_train_timesteps,
                         dtype=jnp.float32)
    return jnp.cumprod(1.0 - betas)


def _reference_forward(latents, noise, raw_params, alphas_cumprod, timesteps):
    """Pure-JAX reference mirroring the torch module (unfused weights,
    identity UNet, NCHW<->NHWC permutes) for validation."""
    (gin_w1, gin_b1, gin_w2, gin_b2, gout_w1, gout_b1, gout_w2, gout_b2) = raw_params
    B = latents.shape[0]
    lat = latents.astype(jnp.float32)
    noi = noise.astype(jnp.float32)
    acp = alphas_cumprod[timesteps].astype(jnp.float32)
    a = jnp.sqrt(acp).reshape(B, 1, 1, 1)
    c = jnp.sqrt(1.0 - acp).reshape(B, 1, 1, 1)
    noisy = a * lat + c * noi
    x = jnp.transpose(noisy, (0, 2, 3, 1))                         # NHWC
    comp = (x @ gin_w1 + gin_b1) @ gin_w2 + gin_b2                 # group_in
    # TODO(synk): UNet2DConditionModel conditioning path has no Pallas
    # equivalent; identity pass-through on the compressed latents.
    pred = (comp @ gout_w1 + gout_b1) @ gout_w2 + gout_b2          # group_out
    pred_nchw = jnp.transpose(pred, (0, 3, 1, 2))
    d = jnp.mean(pred_nchw, axis=0) - jnp.mean(noi, axis=0)
    return jnp.mean(d * d)


# --------------------------------------------------------------------- main --

if __name__ == "__main__":
    key = jax.random.PRNGKey(0)
    k_lat, k_noise, k1, k2, k3, k4, k_lat2, k_noise2 = jax.random.split(key, 8)

    HIDDEN = 512
    gin_w1, gin_b1 = init_linear(k1, 8, HIDDEN)
    gin_w2, gin_b2 = init_linear(k2, HIDDEN, 4)
    gout_w1, gout_b1 = init_linear(k3, 4, HIDDEN)
    gout_w2, gout_b2 = init_linear(k4, HIDDEN, 8)
    raw_params = (gin_w1, gin_b1, gin_w2, gin_b2,
                  gout_w1, gout_b1, gout_w2, gout_b2)
    fused_params = fuse_group_params(*raw_params)
    alphas_cumprod = make_ddpm_alphas_cumprod(1000)

    # --- case 1: bf16 latents, lane-aligned spatial extent (single tile) -----
    B, C, H, W = 2, 8, 16, 16
    latents = jax.random.normal(k_lat, (B, C, H, W), jnp.float32).astype(jnp.bfloat16)
    noise = jax.random.normal(k_noise, (B, C, H, W), jnp.float32).astype(jnp.bfloat16)

    loss = audio_diffusion_forward(latents, noise, fused_params, alphas_cumprod,
                                   validation_mode=True)
    loss = jax.block_until_ready(loss)
    assert jnp.isfinite(loss)

    timesteps = jnp.full((B,), alphas_cumprod.shape[0] // 2, dtype=jnp.int32)
    ref = _reference_forward(latents, noise, raw_params, alphas_cumprod, timesteps)
    ref = jax.block_until_ready(ref)
    assert jnp.allclose(loss, ref, rtol=1e-3, atol=1e-5), (float(loss), float(ref))

    # --- case 2: f32 latents, ragged spatial extent -> padded + masked tiles,
    #             tiny block cap to force the (parallel=2, arbitrary=2) grid ---
    B2, C2, H2, W2 = 2, 8, 18, 23
    latents2 = jax.random.normal(k_lat2, (B2, C2, H2, W2), jnp.float32)
    noise2 = jax.random.normal(k_noise2, (B2, C2, H2, W2), jnp.float32)

    loss2 = audio_diffusion_forward(latents2, noise2, fused_params, alphas_cumprod,
                                    validation_mode=True,
                                    max_block_bytes=B2 * 8 * 128 * 4)
    loss2 = jax.block_until_ready(loss2)
    assert jnp.isfinite(loss2)

    timesteps2 = jnp.full((B2,), alphas_cumprod.shape[0] // 2, dtype=jnp.int32)
    ref2 = _reference_forward(latents2, noise2, raw_params, alphas_cumprod,
                              timesteps2)
    ref2 = jax.block_until_ready(ref2)
    assert jnp.allclose(loss2, ref2, rtol=1e-4, atol=1e-6), (float(loss2), float(ref2))

    print("KERNEL_OK")
</pallas_src>

<mosaic_0001>
module attributes {stable_mosaic.version = 11 : i64} {
  func.func @_fused_forward_kernel(%arg0: i32, %arg1: i32, %arg2: memref<2x2xf32, #tpu.memory_space<smem>>, %arg3: memref<2x8x256xbf16, #tpu.memory_space<vmem>>, %arg4: memref<2x8x256xbf16, #tpu.memory_space<vmem>>, %arg5: memref<8x8xf32, #tpu.memory_space<vmem>>, %arg6: memref<8x1xf32, #tpu.memory_space<vmem>>, %arg7: memref<8x128xf32, #tpu.memory_space<vmem>>, %arg8: memref<8x256xf32, #tpu.memory_space<vmem>>) attributes {dimension_semantics = [#tpu.dimension_semantics<parallel>, #tpu.dimension_semantics<arbitrary>], iteration_bounds = array<i64: 1, 1>, scalar_prefetch = 0 : i64, scratch_operands = 1 : i64, tpu.core_type = #tpu.core_type<tc>, window_params = [{transform_indices = @transform_0, window_bounds = array<i64: 2, 2>}, {transform_indices = @transform_1, window_bounds = array<i64: 2, 8, 256>}, {transform_indices = @transform_2, window_bounds = array<i64: 2, 8, 256>}, {pipeline_mode = #tpu.pipeline_mode<synchronous>, transform_indices = @transform_3, window_bounds = array<i64: 8, 8>}, {pipeline_mode = #tpu.pipeline_mode<synchronous>, transform_indices = @transform_4, window_bounds = array<i64: 8, 1>}, {transform_indices = @transform_5, window_bounds = array<i64: 8, 128>}]} {
    %c0_i32 = arith.constant 0 : i32
    %0 = arith.cmpi eq, %arg1, %c0_i32 : i32
    %1 = arith.extui %0 : i1 to i32
    %c0_i32_0 = arith.constant 0 : i32
    %2 = arith.cmpi ne, %1, %c0_i32_0 : i32
    scf.if %2 {
      %cst_29 = arith.constant 0.000000e+00 : f32
      %44 = vector.broadcast %cst_29 : f32 to vector<8x256xf32>
      %c0_30 = arith.constant 0 : index
      %c0_31 = arith.constant 0 : index
      %45 = vector.load %arg8[%c0_30, %c0_31] : memref<8x256xf32, #tpu.memory_space<vmem>>, vector<8x256xf32>
      tpu.vector_store %arg8[%c0_30, %c0_31], %44 {strides = array<i32>} : memref<8x256xf32, #tpu.memory_space<vmem>>, vector<8x256xf32>,
    } else {
    }
    %c0 = arith.constant 0 : index
    %c0_1 = arith.constant 0 : index
    %3 = memref.load %arg2[%c0, %c0_1] : memref<2x2xf32, #tpu.memory_space<smem>>
    %c1 = arith.constant 1 : index
    %c0_2 = arith.constant 0 : index
    %4 = memref.load %arg2[%c1, %c0_2] : memref<2x2xf32, #tpu.memory_space<smem>>
    %c0_3 = arith.constant 0 : index
    %c0_4 = arith.constant 0 : index
    %c0_5 = arith.constant 0 : index
    %5 = vector.load %arg3[%c0_3, %c0_4, %c0_5] : memref<2x8x256xbf16, #tpu.memory_space<vmem>>, vector<1x8x256xbf16>
    %6 = vector.shape_cast %5 : vector<1x8x256xbf16> to vector<8x256xbf16>
    %7 = arith.extf %6 : vector<8x256xbf16> to vector<8x256xf32>
    %c0_6 = arith.constant 0 : index
    %c0_7 = arith.constant 0 : index
    %c0_8 = arith.constant 0 : index
    %8 = vector.load %arg4[%c0_6, %c0_7, %c0_8] : memref<2x8x256xbf16, #tpu.memory_space<vmem>>, vector<1x8x256xbf16>
    %9 = vector.shape_cast %8 : vector<1x8x256xbf16> to vector<8x256xbf16>
    %10 = arith.extf %9 : vector<8x256xbf16> to vector<8x256xf32>
    %11 = vector.broadcast %3 : f32 to vector<8x256xf32>
    %12 = arith.mulf %11, %7 : vector<8x256xf32>
    %13 = vector.broadcast %4 : f32 to vector<8x256xf32>
    %14 = arith.mulf %13, %10 : vector<8x256xf32>
    %15 = arith.addf %12, %14 : vector<8x256xf32>
    %c0_9 = arith.constant 0 : index
    %c1_10 = arith.constant 1 : index
    %16 = memref.load %arg2[%c0_9, %c1_10] : memref<2x2xf32, #tpu.memory_space<smem>>
    %c1_11 = arith.constant 1 : index
    %c1_12 = arith.constant 1 : index
    %17 = memref.load %arg2[%c1_11, %c1_12] : memref<2x2xf32, #tpu.memory_space<smem>>
    %c1_13 = arith.constant 1 : index
    %c0_14 = arith.constant 0 : index
    %c0_15 = arith.constant 0 : index
    %18 = vector.load %arg3[%c1_13, %c0_14, %c0_15] : memref<2x8x256xbf16, #tpu.memory_space<vmem>>, vector<1x8x256xbf16>
    %19 = vector.shape_cast %18 : vector<1x8x256xbf16> to vector<8x256xbf16>
    %20 = arith.extf %19 : vector<8x256xbf16> to vector<8x256xf32>
    %c1_16 = arith.constant 1 : index
    %c0_17 = arith.constant 0 : index
    %c0_18 = arith.constant 0 : index
    %21 = vector.load %arg4[%c1_16, %c0_17, %c0_18] : memref<2x8x256xbf16, #tpu.memory_space<vmem>>, vector<1x8x256xbf16>
    %22 = vector.shape_cast %21 : vector<1x8x256xbf16> to vector<8x256xbf16>
    %23 = arith.extf %22 : vector<8x256xbf16> to vector<8x256xf32>
    %24 = vector.broadcast %16 : f32 to vector<8x256xf32>
    %25 = arith.mulf %24, %20 : vector<8x256xf32>
    %26 = vector.broadcast %17 : f32 to vector<8x256xf32>
    %27 = arith.mulf %26, %23 : vector<8x256xf32>
    %28 = arith.addf %25, %27 : vector<8x256xf32>
    %29 = arith.addf %15, %28 : vector<8x256xf32>
    %30 = arith.addf %10, %23 : vector<8x256xf32>
    %c0_19 = arith.constant 0 : index
    %c0_20 = arith.constant 0 : index
    %31 = vector.load %arg5[%c0_19, %c0_20] : memref<8x8xf32, #tpu.memory_space<vmem>>, vector<8x8xf32>
    %cst = arith.constant dense<0.000000e+00> : vector<8x256xf32>
    %32 = tpu.matmul %31, %29, %cst {dimension_numbers = #tpu.dot_dimension_numbers<[1], [0], [0], [1], [0, 0, 1, 1], [], []>} : vector<8x8xf32>, vector<8x256xf32>, vector<8x256xf32> -> vector<8x256xf32>
    %c0_21 = arith.constant 0 : index
    %c0_22 = arith.constant 0 : index
    %33 = vector.load %arg6[%c0_21, %c0_22] : memref<8x1xf32, #tpu.memory_space<vmem>>, vector<8x1xf32>
    %34 = vector.broadcast %33 : vector<8x1xf32> to vector<8x256xf32>
    %35 = arith.addf %32, %34 : vector<8x256xf32>
    %36 = arith.subf %35, %30 : vector<8x256xf32>
    %c0_23 = arith.constant 0 : index
    %c0_24 = arith.constant 0 : index
    %37 = vector.load %arg8[%c0_23, %c0_24] : memref<8x256xf32, #tpu.memory_space<vmem>>, vector<8x256xf32>
    %38 = arith.mulf %36, %36 : vector<8x256xf32>
    %39 = arith.addf %37, %38 : vector<8x256xf32>
    %c0_25 = arith.constant 0 : index
    %c0_26 = arith.constant 0 : index
    %40 = vector.load %arg8[%c0_25, %c0_26] : memref<8x256xf32, #tpu.memory_space<vmem>>, vector<8x256xf32>
    tpu.vector_store %arg8[%c0_25, %c0_26], %39 {strides = array<i32>} : memref<8x256xf32, #tpu.memory_space<vmem>>, vector<8x256xf32>,
    %c0_i32_27 = arith.constant 0 : i32
    %41 = arith.cmpi eq, %arg1, %c0_i32_27 : i32
    %42 = arith.extui %41 : i1 to i32
    %c0_i32_28 = arith.constant 0 : i32
    %43 = arith.cmpi ne, %42, %c0_i32_28 : i32
    scf.if %43 {
      %c0_29 = arith.constant 0 : index
      %c0_30 = arith.constant 0 : index
      %44 = vector.load %arg8[%c0_29, %c0_30] : memref<8x256xf32, #tpu.memory_space<vmem>>, vector<8x128xf32>
      %c0_31 = arith.constant 0 : index
      %c128 = arith.constant 128 : index
      %45 = vector.load %arg8[%c0_31, %c128] : memref<8x256xf32, #tpu.memory_space<vmem>>, vector<8x128xf32>
      %46 = arith.addf %44, %45 : vector<8x128xf32>
      %c0_32 = arith.constant 0 : index
      %c0_33 = arith.constant 0 : index
      %47 = vector.load %arg7[%c0_32, %c0_33] : memref<8x128xf32, #tpu.memory_space<vmem>>, vector<8x128xf32>
      tpu.vector_store %arg7[%c0_32, %c0_33], %46 {strides = array<i32>} : memref<8x128xf32, #tpu.memory_space<vmem>>, vector<8x128xf32>,
    } else {
    }
    return
  }
  func.func @transform_0(%arg0: i32, %arg1: i32) -> (i32, i32) {
    %c0_i32 = arith.constant 0 : i32
    %c0_i32_0 = arith.constant 0 : i32
    %c0_i32_1 = arith.constant 0 : i32
    return %c0_i32, %c0_i32_0 : i32, i32
  }
  func.func @transform_1(%arg0: i32, %arg1: i32) -> (i32, i32, i32) {
    %c1_i32 = arith.constant 1 : i32
    %0 = arith.muli %arg0, %c1_i32 : i32
    %1 = arith.addi %0, %arg1 : i32
    %c0_i32 = arith.constant 0 : i32
    %c0_i32_0 = arith.constant 0 : i32
    %c0_i32_1 = arith.constant 0 : i32
    return %c0_i32, %c0_i32_0, %1 : i32, i32, i32
  }
  func.func @transform_2(%arg0: i32, %arg1: i32) -> (i32, i32, i32) {
    %c1_i32 = arith.constant 1 : i32
    %0 = arith.muli %arg0, %c1_i32 : i32
    %1 = arith.addi %0, %arg1 : i32
    %c0_i32 = arith.constant 0 : i32
    %c0_i32_0 = arith.constant 0 : i32
    %c0_i32_1 = arith.constant 0 : i32
    return %c0_i32, %c0_i32_0, %1 : i32, i32, i32
  }
  func.func @transform_3(%arg0: i32, %arg1: i32) -> (i32, i32) {
    %c0_i32 = arith.constant 0 : i32
    %c0_i32_0 = arith.constant 0 : i32
    %c0_i32_1 = arith.constant 0 : i32
    return %c0_i32, %c0_i32_0 : i32, i32
  }
  func.func @transform_4(%arg0: i32, %arg1: i32) -> (i32, i32) {
    %c0_i32 = arith.constant 0 : i32
    %c0_i32_0 = arith.constant 0 : i32
    %c0_i32_1 = arith.constant 0 : i32
    return %c0_i32, %c0_i32_0 : i32, i32
  }
  func.func @transform_5(%arg0: i32, %arg1: i32) -> (i32, i32) {
    %c0_i32 = arith.constant 0 : i32
    %c0_i32_0 = arith.constant 0 : i32
    return %arg0, %c0_i32 : i32, i32
  }
}

</mosaic_0001>

<llo_original>
// kernel: tpu_custom_call.1
$region0: #{tpu_custom_call.1}
  #allocation0 [shape = 'u32[]', space=smem, size = 0x4, offset = 0x4, fixed_abs, tag = 'smem constant byte address 0x4 - core index']
  #allocation1 [shape = 'u32[144,128]{1,0:T(1,128)}', space=vmem, size = 0x12000, scoped, tag = 'internal scratch']
  #allocation2 [shape = 'f32[8,256]{1,0:T(8,128)}', space=vmem, size = 0x2000, scoped, tag = 'scratch operand']
  %s0 = inlined_call_operand.hbm [shape: f32[2,2], index: 0, kind: input, shape index: {}]
  %s1 = inlined_call_operand.hbm [shape: bf16[2,8,256], index: 1, kind: input, shape index: {}]
  %s2 = inlined_call_operand.vmem [shape: bf16[2,8,256], index: 2, kind: input, shape index: {}]
  %s3 = inlined_call_operand.hbm [shape: f32[8,8], index: 3, kind: input, shape index: {}]
  %s4 = inlined_call_operand.vmem [shape: f32[8,1], index: 4, kind: input, shape index: {}]
  %s5 = inlined_call_operand.hbm [shape: f32[8,128], index: 5, kind: output, shape index: {}]
  %s6 = sld [smem:[#allocation0]]
  $region50: #{tpu_custom_call.1} parent=0
    _
  %s8 = ssub.s32 1, %s6
  %s9 = scalar_select 0, %s8, %s6
  $region1: #{tpu_custom_call.1} parent=0
    #allocation3 [shape = 'u8[1024]{0}', space=smem, size = 0x400, scoped, tag = 'input window, operand 0, single buffered']
    #allocation4 [shape = 's32[1]{0}', space=sflag, size = 0x4, scoped, tag = 'scoped memory for tpu_custom_call.1']
    #allocation5 [shape = 's32[1]{0}', space=sflag, size = 0x4, scoped, tag = 'scoped memory for tpu_custom_call.1']
    #allocation6 [shape = 's32[1]{0}', space=sflag, size = 0x4, scoped, tag = 'scoped memory for tpu_custom_call.1']
    #allocation7 [shape = 'u8[8192]{0}', space=vmem, size = 0x2000, scoped, tag = 'input window, operand 1, single buffered']
    #allocation8 [shape = 'u8[4096]{0}', space=vmem, size = 0x1000, scoped, tag = 'input window, operand 3, single buffered']
    #allocation9 [shape = 's32[1]{0}', space=sflag, size = 0x4, scoped, tag = 'scoped memory for tpu_custom_call.1']
    #allocation10 [shape = 'u8[4096]{0}', space=vmem, size = 0x1000, scoped, tag = 'output window, operand 0, single buffered']
    %10 = vsyncpa [#allocation6], 0
    %11 = vsyncpa [#allocation4], 0
    %12 = vsyncpa [#allocation9], 0
    %13 = vsyncpa [#allocation5], 0
    // Predicated region
    $region2: #{tpu_custom_call.1} parent=1 // pred_check
      _
    $region3: #{tpu_custom_call.1} parent=1 // pred_check_branch
      %15 = sbr.rel (0) target = $region5
    $region4: #{tpu_custom_call.1} parent=1 // pred_region
      %s17 = ssub.s32 32, 32
      %18 = vsyncadd [#allocation6], %s17
      %21 = dma.hbm_to_smem %s0, 32, [#allocation3], [#allocation6]
    $region5: #{tpu_custom_call.1} parent=1 // pred_fallthru
      _
    // Predicated region
    $region6: #{tpu_custom_call.1} parent=1 // pred_check
      _
    $region7: #{tpu_custom_call.1} parent=1 // pred_check_branch
      %23 = sbr.rel (0) target = $region9
    $region8: #{tpu_custom_call.1} parent=1 // pred_region
      %s24 = sadd.s32 0, 0
      %s25 = smul.u32 2, %s24
      %s27 = ssub.s32 256, 256
      %28 = vsyncadd [#allocation4], %s27
      %s29 = smul.addr %s25, 64
      %s30 = scalar_lea.hbm %s1, %s29
      %s31 = sshll.u32 [#allocation7], 4
      %s32 = int_to_ptr.vmem [resolvable:$true] %s31
      %37 = dma.hbm_to_vmem [thread:$0]  %s30, 256, %s32, [#allocation4], 128, 128, 8
    $region9: #{tpu_custom_call.1} parent=1 // pred_fallthru
      _
    // Predicated region
    $region10: #{tpu_custom_call.1} parent=1 // pred_check
      _
    $region11: #{tpu_custom_call.1} parent=1 // pred_check_branch
      %39 = sbr.rel (0) target = $region13
    $region12: #{tpu_custom_call.1} parent=1 // pred_region
      %s40 = sadd.s32 0, 0
      %s41 = smul.u32 2, %s40
      %p42 = scmp.lt.s32.totalorder %s41, 1
      %s43 = scalar_select %p42, %s41, 1
      %s44 = smul.addr %s43, 4
      %s45 = scalar_lea.vmem %s2, %s44
      %s46 = sadd.s32 0, 0
      %s47 = smul.u32 2, %s46
    $region13: #{tpu_custom_call.1} parent=1 // pred_fallthru
      _
    // Predicated region
    $region14: #{tpu_custom_call.1} parent=1 // pred_check
      _
    $region15: #{tpu_custom_call.1} parent=1 // pred_check_branch
      %49 = sbr.rel (0) target = $region17
    $region16: #{tpu_custom_call.1} parent=1 // pred_region
      %s51 = ssub.s32 128, 128
      %52 = vsyncadd [#allocation9], %s51
      %s54 = sshll.u32 [#allocation8], 4
      %s55 = int_to_ptr.vmem [resolvable:$true] %s54
      %57 = dma.hbm_to_vmem [thread:$0]  %s3, 128, %s55, [#allocation9]
    $region17: #{tpu_custom_call.1} parent=1 // pred_fallthru
      _
    // Predicated region
    $region18: #{tpu_custom_call.1} parent=1 // pred_check
      _
    $region19: #{tpu_custom_call.1} parent=1 // pred_check_branch
      %59 = sbr.rel (0) target = $region21
    $region20: #{tpu_custom_call.1} parent=1 // pred_region
      _
    $region21: #{tpu_custom_call.1} parent=1 // pred_fallthru
      _
    // Predicated region
    $region22: #{tpu_custom_call.1} parent=1 // pred_check
      _
    $region23: #{tpu_custom_call.1} parent=1 // pred_check_branch
      %61 = sbr.rel (0) target = $region25
    $region24: #{tpu_custom_call.1} parent=1 // pred_region
      %62 = dma.done [#allocation6], 32
    $region25: #{tpu_custom_call.1} parent=1 // pred_fallthru
      _
    // Predicated region
    $region26: #{tpu_custom_call.1} parent=1 // pred_check
      _
    $region27: #{tpu_custom_call.1} parent=1 // pred_check_branch
      %64 = sbr.rel (0) target = $region29
    $region28: #{tpu_custom_call.1} parent=1 // pred_region
      %65 = dma.done [#allocation4], 256
    $region29: #{tpu_custom_call.1} parent=1 // pred_fallthru
      _
    // Predicated region
    $region30: #{tpu_custom_call.1} parent=1 // pred_check
      _
    $region31: #{tpu_custom_call.1} parent=1 // pred_check_branch
      %67 = sbr.rel (0) target = $region33
    $region32: #{tpu_custom_call.1} parent=1 // pred_region
      %68 = dma.done [#allocation9], 128
    $region33: #{tpu_custom_call.1} parent=1 // pred_fallthru
      _
    %69 = sfence
    %s70 = sadd.s32 0, 0
    %s71 = smul.u32 2, %s70
    %p72 = scmp.lt.s32.totalorder %s71, 1
    %s73 = scalar_select %p72, %s71, 1
    %s74 = smul.addr %s73, 4
    %s75 = scalar_lea.vmem %s2, %s74
    %s76 = sadd.s32 0, 0
    %s77 = smul.u32 2, %s76
    %s78 = sadd.s32 0, 0
    %s79 = smul.u32 2, %s78
    %p80 = scmp.lt.s32.totalorder %s79, 1
    %s81 = scalar_select %p80, %s79, 1
    %s82 = smul.addr %s81, 4
    %s83 = scalar_lea.vmem %s2, %s82
    %s84 = sadd.s32 0, 0
    %s85 = smul.u32 2, %s84
    %p86 = scmp.eq.s32.totalorder 0, 0
    // Predicated region
    $region34: #{tpu_custom_call.1} parent=1 // pred_check
      %p87 = pneg %p86
    $region35: #{tpu_custom_call.1} parent=1 // pred_check_branch
      %89 = sbr.rel (%p87) target = $region37
    $region36: #{tpu_custom_call.1} parent=1 // pred_region
      %90 = vst [vmem:[#allocation2] sm:$0xff] 0.0
      %91 = vst [vmem:[#allocation2 + $0x8] sm:$0xff] 0.0
    $region37: #{tpu_custom_call.1} parent=1 // pred_fallthru
      _
    %s92 = sld [smem:[#allocation3]]
    %s93 = sld [smem:[#allocation3 + $0x80]]
    %v94 = vld [vmem:[#allocation7] sm:$0xff]
    %v95 = vunpack.c.l.bf16 %v94
    %v96 = vunpack.c.h.bf16 %v94
    %v97 = vld [vmem:[%s83] sm:$0xff]
    %v98 = vunpack.c.l.bf16 %v97
    %v99 = vunpack.c.h.bf16 %v97
    %v100 = vstv %s92
    %v101 = vmul.f32 %v100, %v95
    %v102 = vmul.f32 %v100, %v96
    %v103 = vstv %s93
    %v104 = vmul.f32 %v103, %v98
    %v105 = vmul.f32 %v103, %v99
    %v106 = vadd.f32 %v101, %v104
    %v107 = vadd.f32 %v102, %v105
    %s108 = sld [smem:[#allocation3 + $0x1]]
    %s109 = sld [smem:[#allocation3 + $0x81]]
    %s110 = scalar_lea.vmem [#allocation7], 8
    %v111 = vld [vmem:[%s110] sm:$0xff]
    %v112 = vunpack.c.l.bf16 %v111
    %v113 = vunpack.c.h.bf16 %v111
    %s114 = scalar_lea.vmem %s83, 8
    %v115 = vld [vmem:[%s114] sm:$0xff]
    %v116 = vunpack.c.l.bf16 %v115
    %v117 = vunpack.c.h.bf16 %v115
    %v118 = vstv %s108
    %v119 = vmul.f32 %v118, %v112
    %v120 = vmul.f32 %v118, %v113
    %v121 = vstv %s109
    %v122 = vmul.f32 %v121, %v116
    %v123 = vmul.f32 %v121, %v117
    %v124 = vadd.f32 %v119, %v122
    %v125 = vadd.f32 %v120, %v123
    %v126 = vadd.f32 %v106, %v124
    %v127 = vadd.f32 %v107, %v125
    %v128 = vadd.f32 %v98, %v116
    %v129 = vadd.f32 %v99, %v117
    %v130 = vld [vmem:[#allocation8] sm:$0xff]
    %v131 = vld [vmem:[%s4] sm:$0xff]
    %133 = vset.pattern.permute.xlu0 0
    %134 = vperm.xlu0 %133, %v131
    %v135 = vpop.permute.xlu0 %134
    %vm137 = vcmask 64512
    %v139 = vsel %vm137, %v130, 0
    %141 = vmatprep.subr.mxu0 %v127
    %142 = vmatpush1.msra.mxu0 %v126
    %143 = vmatprep.subr.mxu0 0.0
    %144 = vmatpush1.msra.mxu0 0.0
    %145 = vmatprep.subr.mxu0 0.0
    %146 = vmatpush1.msra.mxu0 0.0
    %147 = vmatprep.subr.mxu0 0.0
    %148 = vmatpush1.msra.mxu0 0.0
    %149 = vmatprep.subr.mxu0 0.0
    %150 = vmatpush1.msra.mxu0 0.0
    %151 = vmatprep.subr.mxu0 0.0
    %152 = vmatpush1.msra.mxu0 0.0
    %153 = vmatprep.subr.mxu0 0.0
    %154 = vmatpush1.msra.mxu0 0.0
    %155 = vmatprep.subr.mxu0 0.0
    %156 = vmatpush1.msra.mxu0 0.0
    %157 = vmatprep.subr.mxu0 0.0
    %158 = vmatpush1.msra.mxu0 0.0
    %159 = vmatprep.subr.mxu0 0.0
    %160 = vmatpush1.msra.mxu0 0.0
    %161 = vmatprep.subr.mxu0 0.0
    %162 = vmatpush1.msra.mxu0 0.0
    %163 = vmatprep.subr.mxu0 0.0
    %164 = vmatpush1.msra.mxu0 0.0
    %165 = vmatprep.subr.mxu0 0.0
    %166 = vmatpush1.msra.mxu0 0.0
    %167 = vmatprep.subr.mxu0 0.0
    %168 = vmatpush1.msra.mxu0 0.0
    %169 = vmatprep.subr.mxu0 0.0
    %170 = vmatpush1.msra.mxu0 0.0
    %171 = vmatprep.subr.mxu0 0.0
    %172 = vmatpush1.msra.mxu0 0.0
    %173 = vmatprep.subr.mxu0 0.0
    %174 = vmatpush1.msra.mxu0 0.0
    %175 = vmatprep.subr.mxu0 0.0
    %176 = vmatpush1.msra.mxu0 0.0
    %177 = vmatprep.subr.mxu0 0.0
    %178 = vmatpush1.msra.mxu0 0.0
    %179 = vmatprep.subr.mxu0 0.0
    %180 = vmatpush1.msra.mxu0 0.0
    %181 = vmatprep.subr.mxu0 0.0
    %182 = vmatpush1.msra.mxu0 0.0
    %183 = vmatprep.subr.mxu0 0.0
    %184 = vmatpush1.msra.mxu0 0.0
    %185 = vmatprep.subr.mxu0 0.0
    %186 = vmatpush1.msra.mxu0 0.0
    %187 = vmatprep.subr.mxu0 0.0
    %188 = vmatpush1.msra.mxu0 0.0
    %189 = vmatprep.subr.mxu0 0.0
    %190 = vmatpush1.msra.mxu0 0.0
    %191 = vmatprep.subr.mxu0 0.0
    %192 = vmatpush1.msra.mxu0 0.0
    %193 = vmatprep.subr.mxu0 0.0
    %194 = vmatpush1.msra.mxu0 0.0
    %195 = vmatprep.subr.mxu0 0.0
    %196 = vmatpush1.msra.mxu0 0.0
    %197 = vmatprep.subr.mxu0 0.0
    %198 = vmatpush1.msra.mxu0 0.0
    %199 = vmatprep.subr.mxu0 0.0
    %200 = vmatpush1.msra.mxu0 0.0
    %201 = vmatprep.subr.mxu0 0.0
    %202 = vmatpush1.msra.mxu0 0.0
    %203 = vmatprep.subr.mxu0 0.0
    %204 = vmatpush1.msra.mxu0 0.0
    %205 = vmatprep.mubr.f32.mxu0 0.0
    %206 = vmatmul.mubr.f32.gmra.mrb[0].mxu0 %v139
    %v207 = vpop.f32.mrb[0].mxu0
    %v208 = vadd.f32 %v135, %v207
    %v209 = vpop.f32.mrb[0].mxu0
    %v210 = vadd.f32 %v135, %v209
    %211 = vdwg.mxu0
    %v212 = vsub.f32 %v208, %v128
    %v213 = vsub.f32 %v210, %v129
    %v214 = vld [vmem:[#allocation2] sm:$0xff]
    %v215 = vld [vmem:[#allocation2 + $0x8] sm:$0xff]
    %v216 = vmul.f32 %v212, %v212
    %v217 = vmul.f32 %v213, %v213
    %v218 = vadd.f32 %v214, %v216
    %v219 = vadd.f32 %v215, %v217
    %220 = vst [vmem:[#allocation2] sm:$0xff] %v218
    %221 = vst [vmem:[#allocation2 + $0x8] sm:$0xff] %v219
    // Predicated region
    $region38: #{tpu_custom_call.1} parent=1 // pred_check
      %p222 = pneg %p86
    $region39: #{tpu_custom_call.1} parent=1 // pred_check_branch
      %224 = sbr.rel (%p222) target = $region41
    $region40: #{tpu_custom_call.1} parent=1 // pred_region
      %v225 = vld [vmem:[#allocation2] sm:$0xff]
      %v226 = vld [vmem:[#allocation2 + $0x8] sm:$0xff]
      %v227 = vadd.f32 %v225, %v226
      %228 = vst [vmem:[#allocation10] sm:$0xff] %v227
    $region41: #{tpu_custom_call.1} parent=1 // pred_fallthru
      _
    // Predicated region
    $region42: #{tpu_custom_call.1} parent=1 // pred_check
      _
    $region43: #{tpu_custom_call.1} parent=1 // pred_check_branch
      %230 = sbr.rel (0) target = $region45
    $region44: #{tpu_custom_call.1} parent=1 // pred_region
      %s232 = ssub.s32 128, 128
      %233 = vsyncadd [#allocation5], %s232
      %s235 = sshll.u32 [#allocation10], 4
      %s236 = int_to_ptr.vmem [resolvable:$true] %s235
      %238 = dma.vmem_to_hbm [thread:$0]  %s236, 128, %s5, [#allocation5]
    $region45: #{tpu_custom_call.1} parent=1 // pred_fallthru
      _
    // Predicated region
    $region46: #{tpu_custom_call.1} parent=1 // pred_check
      _
    $region47: #{tpu_custom_call.1} parent=1 // pred_check_branch
      %240 = sbr.rel (0) target = $region49
    $region48: #{tpu_custom_call.1} parent=1 // pred_region
      %241 = dma.done [#allocation5], 128
    $region49: #{tpu_custom_call.1} parent=1 // pred_fallthru
      _
    %242 = vsyncpa [#allocation4], 1
    %243 = vsyncpa [#allocation9], 1
    %244 = vsyncpa [#allocation5], 1
    %245 = vsyncpa [#allocation6], 1

</llo_original>
